<compile_context>
chip_gen: v6e
topology: v6e:2x2x1
jax: 0.10.0
libtpu: 0.0.40
codegen_flags: <defaults>
</compile_context>

<pallas_src>
import functools

import jax
import jax.numpy as jnp
from jax.experimental import pallas as pl
from jax.experimental.pallas import tpu as pltpu

_LANE = 128
_MAX_TILE = 1024          # ~amortizes the ~0.35 us/step fixed cost; VMEM stays tiny


def _round_up(n, m):
    return ((n + m - 1) // m) * m


def _choose_batch_tile(B, sublane):
    """Large tiles; split into 2 'parallel' steps when B is big enough (v7x)."""
    full = _round_up(max(B, 1), sublane)
    if full > _MAX_TILE:
        return _MAX_TILE
    if full > _LANE:
        # >=2 grid steps so both v7x TensorCores are used; the one extra
        # ~0.35 us step on single-TC v5e/v6e is negligible at this size.
        return _round_up((B + 1) // 2, sublane)
    return full


def dqn_4hl_kernel(x_ref,
                   w1_ref, b1_ref,
                   w2_ref, b2_ref,
                   w3_ref, b3_ref,
                   w4_ref, b4_ref,
                   w5_ref, b5_ref,
                   o_ref, *, keep_bf16):
    """Whole forward pass for one batch tile, fully resident in VMEM."""
    f32 = jnp.float32

    def dense(h, w_ref, b_ref, relu):
        # MXU matmul, f32 accumulation; bias-add in f32.
        y = jnp.dot(h, w_ref[...], preferred_element_type=f32)
        y = y + b_ref[...].astype(f32)            # bias is (1, out) -> broadcast
        if not relu:
            return y                               # final layer: f32, no ReLU
        y = jnp.maximum(y, 0.0)
        # bf16 path (v6e/v7x): keep activations bf16 between layers, exactly one
        # cast per layer (right after the ReLU).  f32 path: no casts at all.
        return y.astype(jnp.bfloat16) if keep_bf16 else y

    h = x_ref[...]                                 # f32 or bf16, no upcast
    h = dense(h, w1_ref, b1_ref, True)
    h = dense(h, w2_ref, b2_ref, True)
    h = dense(h, w3_ref, b3_ref, True)
    h = dense(h, w4_ref, b4_ref, True)
    out = dense(h, w5_ref, b5_ref, False)          # (tile, n_act_pad) f32
    o_ref[...] = out.astype(o_ref.dtype)           # narrow (8-lane) store; tiny bytes


def prepare_params(params, *, compute_dtype=jnp.float32):
    """One-time padding/casting of the parameter pytree (NOT per forward call).

    params = [(w1, b1), ..., (w5, b5)] with w: (in, out), b: (1, out).
    Use compute_dtype=jnp.bfloat16 only on v6e/v7x; keep f32 on v5e.
    """
    SUB = 8
    n_obs = params[0][0].shape[0]
    n_actions = params[-1][0].shape[1]
    n_act_pad = _round_up(n_actions, SUB)          # pad to 8, not 128: ~16x fewer
    w5, b5 = params[-1]                            # output-store HBM bytes
    w5 = jnp.pad(w5, ((0, 0), (0, n_act_pad - n_actions)))
    b5 = jnp.pad(b5, ((0, 0), (0, n_act_pad - n_actions)))
    plist = list(params[:-1]) + [(w5, b5)]

    flat = []
    for (w, b) in plist:
        flat.append(w.astype(compute_dtype))       # bf16 halves weight VMEM/DMA
        flat.append(b.astype(jnp.float32))         # biases stay f32 (f32 add)
    return {
        "flat": tuple(flat),
        "n_obs": n_obs,
        "n_actions": n_actions,
        "n_act_pad": n_act_pad,
        "compute_dtype": jnp.dtype(compute_dtype),
    }


def dqn_4hl_forward(x, prepared, *, batch_tile=None):
    """Forward pass.  `prepared` comes from prepare_params() (hoisted work)."""
    keep_bf16 = prepared["compute_dtype"] == jnp.dtype(jnp.bfloat16)
    sublane = 16 if keep_bf16 else 8               # bf16 packs 2 rows per sublane

    B, n_obs = x.shape
    assert n_obs == prepared["n_obs"]
    n_actions = prepared["n_actions"]
    n_act_pad = prepared["n_act_pad"]

    if keep_bf16 and x.dtype != jnp.bfloat16:
        x = x.astype(jnp.bfloat16)                 # halves the x DMA; MXU-native

    if batch_tile is None:
        batch_tile = _choose_batch_tile(B, sublane)
    else:
        batch_tile = _round_up(batch_tile, sublane)
    b_pad = _round_up(B, batch_tile)
    if b_pad != B:
        x = jnp.pad(x, ((0, b_pad - B), (0, 0)))   # padded rows sliced off below
    grid = (b_pad // batch_tile,)

    vmem_resident = pl.BlockSpec(memory_space=pltpu.MemorySpace.VMEM)
    in_specs = [pl.BlockSpec((batch_tile, n_obs), lambda i: (i, 0))]  # x: tiled
    in_specs += [vmem_resident] * len(prepared["flat"])               # params: whole

    out = pl.pallas_call(
        functools.partial(dqn_4hl_kernel, keep_bf16=keep_bf16),
        out_shape=jax.ShapeDtypeStruct((b_pad, n_act_pad), jnp.float32),
        grid_spec=pl.GridSpec(
            grid=grid,
            in_specs=in_specs,
            out_specs=pl.BlockSpec((batch_tile, n_act_pad), lambda i: (i, 0)),
        ),
        compiler_params=pltpu.CompilerParams(
            dimension_semantics=("parallel",),     # megacore-shardable on v7x
        ),
    )(x, *prepared["flat"])

    # Strip batch padding and the (<=8-wide) action padding.
    return out[:B, :n_actions]


def init_linear(key, fan_in, fan_out):
    """Deterministic init mimicking torch.nn.Linear's default uniform init."""
    kw, kb = jax.random.split(key)
    bound = 1.0 / jnp.sqrt(jnp.float32(fan_in))
    # PyTorch stores weight as (out, in); we store (in, out) so kernel does x @ W.
    w = jax.random.uniform(kw, (fan_in, fan_out), jnp.float32, -bound, bound)
    b = jax.random.uniform(kb, (1, fan_out), jnp.float32, -bound, bound)
    return w, b


def reference_forward(x, params):
    h = x
    for (w, b) in params[:-1]:
        h = jnp.maximum(h @ w + b, 0.0)
    w, b = params[-1]
    return h @ w + b


if __name__ == "__main__":
    # Small shapes consistent with DQN_4HL(n_observations, n_actions, n_nodes)
    batch = 8
    n_observations = 16
    n_nodes = 32
    n_actions = 4

    key = jax.random.PRNGKey(0)
    k_x, k1, k2, k3, k4, k5 = jax.random.split(key, 6)

    x = jax.random.normal(k_x, (batch, n_observations), jnp.float32)
    params = [
        init_linear(k1, n_observations, n_nodes),
        init_linear(k2, n_nodes, n_nodes),
        init_linear(k3, n_nodes, n_nodes),
        init_linear(k4, n_nodes, n_nodes),
        init_linear(k5, n_nodes, n_actions),
    ]

    # Hoisted, once-per-parameter-update preparation (pad w5/b5, dtype casts).
    prep_f32 = prepare_params(params)                       # f32 (v5e-safe default)
    prep_bf16 = prepare_params(params, compute_dtype=jnp.bfloat16)  # v6e/v7x

    # 1) f32 path, tiny batch (single grid step) -- tight correctness check.
    out = jax.block_until_ready(dqn_4hl_forward(x, prep_f32))
    ref = reference_forward(x, params)
    assert out.shape == (batch, n_actions)
    assert jnp.allclose(out, ref, atol=1e-4, rtol=1e-4), "f32 mismatch vs reference"

    # 2) Non-tile-aligned larger batch, default tiling -> two "parallel" grid
    #    steps (exercises batch padding + multi-step grid) -- still exact.
    xb = jax.random.normal(jax.random.PRNGKey(1), (200, n_observations), jnp.float32)
    out_b = jax.block_until_ready(dqn_4hl_forward(xb, prep_f32))
    ref_b = reference_forward(xb, params)
    assert out_b.shape == (200, n_actions)
    assert jnp.allclose(out_b, ref_b, atol=1e-4, rtol=1e-4), "padded-batch mismatch"

    # 3) Explicit small tile (4-step grid) -- exercises the generic grid path.
    out_t = jax.block_until_ready(dqn_4hl_forward(xb, prep_f32, batch_tile=64))
    assert jnp.allclose(out_t, ref_b, atol=1e-4, rtol=1e-4), "explicit-tile mismatch"

    # 4) bf16 MXU-input path (f32 accumulation), v6e/v7x style -- loose tolerance.
    out_bf = jax.block_until_ready(dqn_4hl_forward(xb, prep_bf16))
    assert jnp.allclose(out_bf, ref_b, atol=1e-1, rtol=1e-1), "bf16 mismatch"

    print("KERNEL_OK")
</pallas_src>

<mosaic_0001>
module attributes {stable_mosaic.version = 11 : i64} {
  func.func @dqn_4hl_kernel(%arg0: i32, %arg1: memref<8x16xf32, #tpu.memory_space<vmem>>, %arg2: memref<16x32xf32, #tpu.memory_space<vmem>>, %arg3: memref<1x32xf32, #tpu.memory_space<vmem>>, %arg4: memref<32x32xf32, #tpu.memory_space<vmem>>, %arg5: memref<1x32xf32, #tpu.memory_space<vmem>>, %arg6: memref<32x32xf32, #tpu.memory_space<vmem>>, %arg7: memref<1x32xf32, #tpu.memory_space<vmem>>, %arg8: memref<32x32xf32, #tpu.memory_space<vmem>>, %arg9: memref<1x32xf32, #tpu.memory_space<vmem>>, %arg10: memref<32x8xf32, #tpu.memory_space<vmem>>, %arg11: memref<1x8xf32, #tpu.memory_space<vmem>>, %arg12: memref<8x8xf32, #tpu.memory_space<vmem>>) attributes {dimension_semantics = [#tpu.dimension_semantics<parallel>], iteration_bounds = array<i64: 1>, scalar_prefetch = 0 : i64, scratch_operands = 0 : i64, tpu.core_type = #tpu.core_type<tc>, window_params = [{transform_indices = @transform_0, window_bounds = array<i64: 8, 16>}, {pipeline_mode = #tpu.pipeline_mode<synchronous>, transform_indices = @transform_1, window_bounds = array<i64: 16, 32>}, {pipeline_mode = #tpu.pipeline_mode<synchronous>, transform_indices = @transform_2, window_bounds = array<i64: 1, 32>}, {pipeline_mode = #tpu.pipeline_mode<synchronous>, transform_indices = @transform_3, window_bounds = array<i64: 32, 32>}, {pipeline_mode = #tpu.pipeline_mode<synchronous>, transform_indices = @transform_4, window_bounds = array<i64: 1, 32>}, {pipeline_mode = #tpu.pipeline_mode<synchronous>, transform_indices = @transform_5, window_bounds = array<i64: 32, 32>}, {pipeline_mode = #tpu.pipeline_mode<synchronous>, transform_indices = @transform_6, window_bounds = array<i64: 1, 32>}, {pipeline_mode = #tpu.pipeline_mode<synchronous>, transform_indices = @transform_7, window_bounds = array<i64: 32, 32>}, {pipeline_mode = #tpu.pipeline_mode<synchronous>, transform_indices = @transform_8, window_bounds = array<i64: 1, 32>}, {pipeline_mode = #tpu.pipeline_mode<synchronous>, transform_indices = @transform_9, window_bounds = array<i64: 32, 8>}, {pipeline_mode = #tpu.pipeline_mode<synchronous>, transform_indices = @transform_10, window_bounds = array<i64: 1, 8>}, {transform_indices = @transform_11, window_bounds = array<i64: 8, 8>}]} {
    %c0 = arith.constant 0 : index
    %c0_0 = arith.constant 0 : index
    %0 = vector.load %arg1[%c0, %c0_0] : memref<8x16xf32, #tpu.memory_space<vmem>>, vector<8x16xf32>
    %c0_1 = arith.constant 0 : index
    %c0_2 = arith.constant 0 : index
    %1 = vector.load %arg2[%c0_1, %c0_2] : memref<16x32xf32, #tpu.memory_space<vmem>>, vector<16x32xf32>
    %cst = arith.constant dense<0.000000e+00> : vector<8x32xf32>
    %2 = tpu.matmul %0, %1, %cst {dimension_numbers = #tpu.dot_dimension_numbers<[1], [0], [0], [1], [0, 0, 1, 1], [], []>} : vector<8x16xf32>, vector<16x32xf32>, vector<8x32xf32> -> vector<8x32xf32>
    %c0_3 = arith.constant 0 : index
    %c0_4 = arith.constant 0 : index
    %3 = vector.load %arg3[%c0_3, %c0_4] : memref<1x32xf32, #tpu.memory_space<vmem>>, vector<1x32xf32>
    %4 = vector.broadcast %3 : vector<1x32xf32> to vector<8x32xf32>
    %5 = arith.addf %2, %4 : vector<8x32xf32>
    %cst_5 = arith.constant 0.000000e+00 : f32
    %6 = vector.broadcast %cst_5 : f32 to vector<8x32xf32>
    %7 = arith.maximumf %5, %6 : vector<8x32xf32>
    %c0_6 = arith.constant 0 : index
    %c0_7 = arith.constant 0 : index
    %8 = vector.load %arg4[%c0_6, %c0_7] : memref<32x32xf32, #tpu.memory_space<vmem>>, vector<32x32xf32>
    %cst_8 = arith.constant dense<0.000000e+00> : vector<8x32xf32>
    %9 = tpu.matmul %7, %8, %cst_8 {dimension_numbers = #tpu.dot_dimension_numbers<[1], [0], [0], [1], [0, 0, 1, 1], [], []>} : vector<8x32xf32>, vector<32x32xf32>, vector<8x32xf32> -> vector<8x32xf32>
    %c0_9 = arith.constant 0 : index
    %c0_10 = arith.constant 0 : index
    %10 = vector.load %arg5[%c0_9, %c0_10] : memref<1x32xf32, #tpu.memory_space<vmem>>, vector<1x32xf32>
    %11 = vector.broadcast %10 : vector<1x32xf32> to vector<8x32xf32>
    %12 = arith.addf %9, %11 : vector<8x32xf32>
    %cst_11 = arith.constant 0.000000e+00 : f32
    %13 = vector.broadcast %cst_11 : f32 to vector<8x32xf32>
    %14 = arith.maximumf %12, %13 : vector<8x32xf32>
    %c0_12 = arith.constant 0 : index
    %c0_13 = arith.constant 0 : index
    %15 = vector.load %arg6[%c0_12, %c0_13] : memref<32x32xf32, #tpu.memory_space<vmem>>, vector<32x32xf32>
    %cst_14 = arith.constant dense<0.000000e+00> : vector<8x32xf32>
    %16 = tpu.matmul %14, %15, %cst_14 {dimension_numbers = #tpu.dot_dimension_numbers<[1], [0], [0], [1], [0, 0, 1, 1], [], []>} : vector<8x32xf32>, vector<32x32xf32>, vector<8x32xf32> -> vector<8x32xf32>
    %c0_15 = arith.constant 0 : index
    %c0_16 = arith.constant 0 : index
    %17 = vector.load %arg7[%c0_15, %c0_16] : memref<1x32xf32, #tpu.memory_space<vmem>>, vector<1x32xf32>
    %18 = vector.broadcast %17 : vector<1x32xf32> to vector<8x32xf32>
    %19 = arith.addf %16, %18 : vector<8x32xf32>
    %cst_17 = arith.constant 0.000000e+00 : f32
    %20 = vector.broadcast %cst_17 : f32 to vector<8x32xf32>
    %21 = arith.maximumf %19, %20 : vector<8x32xf32>
    %c0_18 = arith.constant 0 : index
    %c0_19 = arith.constant 0 : index
    %22 = vector.load %arg8[%c0_18, %c0_19] : memref<32x32xf32, #tpu.memory_space<vmem>>, vector<32x32xf32>
    %cst_20 = arith.constant dense<0.000000e+00> : vector<8x32xf32>
    %23 = tpu.matmul %21, %22, %cst_20 {dimension_numbers = #tpu.dot_dimension_numbers<[1], [0], [0], [1], [0, 0, 1, 1], [], []>} : vector<8x32xf32>, vector<32x32xf32>, vector<8x32xf32> -> vector<8x32xf32>
    %c0_21 = arith.constant 0 : index
    %c0_22 = arith.constant 0 : index
    %24 = vector.load %arg9[%c0_21, %c0_22] : memref<1x32xf32, #tpu.memory_space<vmem>>, vector<1x32xf32>
    %25 = vector.broadcast %24 : vector<1x32xf32> to vector<8x32xf32>
    %26 = arith.addf %23, %25 : vector<8x32xf32>
    %cst_23 = arith.constant 0.000000e+00 : f32
    %27 = vector.broadcast %cst_23 : f32 to vector<8x32xf32>
    %28 = arith.maximumf %26, %27 : vector<8x32xf32>
    %c0_24 = arith.constant 0 : index
    %c0_25 = arith.constant 0 : index
    %29 = vector.load %arg10[%c0_24, %c0_25] : memref<32x8xf32, #tpu.memory_space<vmem>>, vector<32x8xf32>
    %cst_26 = arith.constant dense<0.000000e+00> : vector<8x8xf32>
    %30 = tpu.matmul %28, %29, %cst_26 {dimension_numbers = #tpu.dot_dimension_numbers<[1], [0], [0], [1], [0, 0, 1, 1], [], []>} : vector<8x32xf32>, vector<32x8xf32>, vector<8x8xf32> -> vector<8x8xf32>
    %c0_27 = arith.constant 0 : index
    %c0_28 = arith.constant 0 : index
    %31 = vector.load %arg11[%c0_27, %c0_28] : memref<1x8xf32, #tpu.memory_space<vmem>>, vector<1x8xf32>
    %32 = vector.broadcast %31 : vector<1x8xf32> to vector<8x8xf32>
    %33 = arith.addf %30, %32 : vector<8x8xf32>
    %c0_29 = arith.constant 0 : index
    %c0_30 = arith.constant 0 : index
    %34 = vector.load %arg12[%c0_29, %c0_30] : memref<8x8xf32, #tpu.memory_space<vmem>>, vector<8x8xf32>
    tpu.vector_store %arg12[%c0_29, %c0_30], %33 {strides = array<i32>} : memref<8x8xf32, #tpu.memory_space<vmem>>, vector<8x8xf32>,
    return
  }
  func.func @transform_0(%arg0: i32) -> (i32, i32) {
    %c0_i32 = arith.constant 0 : i32
    %c0_i32_0 = arith.constant 0 : i32
    return %arg0, %c0_i32 : i32, i32
  }
  func.func @transform_1(%arg0: i32) -> (i32, i32) {
    %c0_i32 = arith.constant 0 : i32
    %c0_i32_0 = arith.constant 0 : i32
    %c0_i32_1 = arith.constant 0 : i32
    return %c0_i32, %c0_i32_0 : i32, i32
  }
  func.func @transform_2(%arg0: i32) -> (i32, i32) {
    %c0_i32 = arith.constant 0 : i32
    %c0_i32_0 = arith.constant 0 : i32
    %c0_i32_1 = arith.constant 0 : i32
    return %c0_i32, %c0_i32_0 : i32, i32
  }
  func.func @transform_3(%arg0: i32) -> (i32, i32) {
    %c0_i32 = arith.constant 0 : i32
    %c0_i32_0 = arith.constant 0 : i32
    %c0_i32_1 = arith.constant 0 : i32
    return %c0_i32, %c0_i32_0 : i32, i32
  }
  func.func @transform_4(%arg0: i32) -> (i32, i32) {
    %c0_i32 = arith.constant 0 : i32
    %c0_i32_0 = arith.constant 0 : i32
    %c0_i32_1 = arith.constant 0 : i32
    return %c0_i32, %c0_i32_0 : i32, i32
  }
  func.func @transform_5(%arg0: i32) -> (i32, i32) {
    %c0_i32 = arith.constant 0 : i32
    %c0_i32_0 = arith.constant 0 : i32
    %c0_i32_1 = arith.constant 0 : i32
    return %c0_i32, %c0_i32_0 : i32, i32
  }
  func.func @transform_6(%arg0: i32) -> (i32, i32) {
    %c0_i32 = arith.constant 0 : i32
    %c0_i32_0 = arith.constant 0 : i32
    %c0_i32_1 = arith.constant 0 : i32
    return %c0_i32, %c0_i32_0 : i32, i32
  }
  func.func @transform_7(%arg0: i32) -> (i32, i32) {
    %c0_i32 = arith.constant 0 : i32
    %c0_i32_0 = arith.constant 0 : i32
    %c0_i32_1 = arith.constant 0 : i32
    return %c0_i32, %c0_i32_0 : i32, i32
  }
  func.func @transform_8(%arg0: i32) -> (i32, i32) {
    %c0_i32 = arith.constant 0 : i32
    %c0_i32_0 = arith.constant 0 : i32
    %c0_i32_1 = arith.constant 0 : i32
    return %c0_i32, %c0_i32_0 : i32, i32
  }
  func.func @transform_9(%arg0: i32) -> (i32, i32) {
    %c0_i32 = arith.constant 0 : i32
    %c0_i32_0 = arith.constant 0 : i32
    %c0_i32_1 = arith.constant 0 : i32
    return %c0_i32, %c0_i32_0 : i32, i32
  }
  func.func @transform_10(%arg0: i32) -> (i32, i32) {
    %c0_i32 = arith.constant 0 : i32
    %c0_i32_0 = arith.constant 0 : i32
    %c0_i32_1 = arith.constant 0 : i32
    return %c0_i32, %c0_i32_0 : i32, i32
  }
  func.func @transform_11(%arg0: i32) -> (i32, i32) {
    %c0_i32 = arith.constant 0 : i32
    %c0_i32_0 = arith.constant 0 : i32
    return %arg0, %c0_i32 : i32, i32
  }
}

</mosaic_0001>

<llo_original>
// kernel: tpu_custom_call.1
$region0: #{tpu_custom_call.1}
  #allocation0 [shape = 'u32[]', space=smem, size = 0x4, offset = 0x4, fixed_abs, tag = 'smem constant byte address 0x4 - core index']
  #allocation1 [shape = 'u32[144,128]{1,0:T(1,128)}', space=vmem, size = 0x12000, scoped, tag = 'internal scratch']
  %s0 = inlined_call_operand.vmem [shape: f32[8,16], index: 0, kind: input, shape index: {}]
  %s1 = inlined_call_operand.hbm [shape: f32[16,32], index: 1, kind: input, shape index: {}]
  %s2 = inlined_call_operand.vmem [shape: f32[1,32], index: 2, kind: input, shape index: {}]
  %s3 = inlined_call_operand.vmem [shape: f32[32,32], index: 3, kind: input, shape index: {}]
  %s4 = inlined_call_operand.vmem [shape: f32[1,32], index: 4, kind: input, shape index: {}]
  %s5 = inlined_call_operand.hbm [shape: f32[32,32], index: 5, kind: input, shape index: {}]
  %s6 = inlined_call_operand.vmem [shape: f32[1,32], index: 6, kind: input, shape index: {}]
  %s7 = inlined_call_operand.hbm [shape: f32[32,32], index: 7, kind: input, shape index: {}]
  %s8 = inlined_call_operand.vmem [shape: f32[1,32], index: 8, kind: input, shape index: {}]
  %s9 = inlined_call_operand.vmem [shape: f32[32,8], index: 9, kind: input, shape index: {}]
  %s10 = inlined_call_operand.vmem [shape: f32[1,8], index: 10, kind: input, shape index: {}]
  %s11 = inlined_call_operand.hbm [shape: f32[8,8], index: 11, kind: output, shape index: {}]
  %s12 = sld [smem:[#allocation0]]
  $region66: #{tpu_custom_call.1} parent=0
    _
  %s14 = ssub.s32 1, %s12
  %s15 = scalar_select 0, %s14, %s12
  $region1: #{tpu_custom_call.1} parent=0
    #allocation2 [shape = 'u8[8192]{0}', space=vmem, size = 0x2000, scoped, tag = 'input window, operand 1, single buffered']
    #allocation3 [shape = 's32[1]{0}', space=sflag, size = 0x4, scoped, tag = 'scoped memory for tpu_custom_call.1']
    #allocation4 [shape = 's32[1]{0}', space=sflag, size = 0x4, scoped, tag = 'scoped memory for tpu_custom_call.1']
    #allocation5 [shape = 'u8[16384]{0}', space=vmem, size = 0x4000, scoped, tag = 'input window, operand 5, single buffered']
    #allocation6 [shape = 's32[1]{0}', space=sflag, size = 0x4, scoped, tag = 'scoped memory for tpu_custom_call.1']
    #allocation7 [shape = 'u8[16384]{0}', space=vmem, size = 0x4000, scoped, tag = 'input window, operand 7, single buffered']
    #allocation8 [shape = 'u8[4096]{0}', space=vmem, size = 0x1000, scoped, tag = 'output window, operand 0, single buffered']
    %16 = vsyncpa [#allocation3], 0
    %17 = vsyncpa [#allocation6], 0
    %18 = vsyncpa [#allocation4], 0
    // Predicated region
    $region2: #{tpu_custom_call.1} parent=1 // pred_check
      _
    $region3: #{tpu_custom_call.1} parent=1 // pred_check_branch
      %20 = sbr.rel (0) target = $region5
    $region4: #{tpu_custom_call.1} parent=1 // pred_region
      _
    $region5: #{tpu_custom_call.1} parent=1 // pred_fallthru
      _
    // Predicated region
    $region6: #{tpu_custom_call.1} parent=1 // pred_check
      _
    $region7: #{tpu_custom_call.1} parent=1 // pred_check_branch
      %22 = sbr.rel (0) target = $region9
    $region8: #{tpu_custom_call.1} parent=1 // pred_region
      %s24 = ssub.s32 256, 256
      %25 = vsyncadd [#allocation3], %s24
      %s26 = sshll.u32 [#allocation2], 4
      %s27 = int_to_ptr.vmem [resolvable:$true] %s26
      %32 = dma.hbm_to_vmem [thread:$0]  %s1, 256, %s27, [#allocation3], 128, 128, 8
    $region9: #{tpu_custom_call.1} parent=1 // pred_fallthru
      _
    // Predicated region
    $region10: #{tpu_custom_call.1} parent=1 // pred_check
      _
    $region11: #{tpu_custom_call.1} parent=1 // pred_check_branch
      %34 = sbr.rel (0) target = $region13
    $region12: #{tpu_custom_call.1} parent=1 // pred_region
      _
    $region13: #{tpu_custom_call.1} parent=1 // pred_fallthru
      _
    // Predicated region
    $region14: #{tpu_custom_call.1} parent=1 // pred_check
      _
    $region15: #{tpu_custom_call.1} parent=1 // pred_check_branch
      %36 = sbr.rel (0) target = $region17
    $region16: #{tpu_custom_call.1} parent=1 // pred_region
      _
    $region17: #{tpu_custom_call.1} parent=1 // pred_fallthru
      _
    // Predicated region
    $region18: #{tpu_custom_call.1} parent=1 // pred_check
      _
    $region19: #{tpu_custom_call.1} parent=1 // pred_check_branch
      %38 = sbr.rel (0) target = $region21
    $region20: #{tpu_custom_call.1} parent=1 // pred_region
      _
    $region21: #{tpu_custom_call.1} parent=1 // pred_fallthru
      _
    // Predicated region
    $region22: #{tpu_custom_call.1} parent=1 // pred_check
      _
    $region23: #{tpu_custom_call.1} parent=1 // pred_check_branch
      %40 = sbr.rel (0) target = $region25
    $region24: #{tpu_custom_call.1} parent=1 // pred_region
      %s42 = ssub.s32 512, 512
      %43 = vsyncadd [#allocation6], %s42
      %s44 = sshll.u32 [#allocation5], 4
      %s45 = int_to_ptr.vmem [resolvable:$true] %s44
      %50 = dma.hbm_to_vmem [thread:$0]  %s5, 512, %s45, [#allocation6], 128, 128, 8
    $region25: #{tpu_custom_call.1} parent=1 // pred_fallthru
      _
    // Predicated region
    $region26: #{tpu_custom_call.1} parent=1 // pred_check
      _
    $region27: #{tpu_custom_call.1} parent=1 // pred_check_branch
      %52 = sbr.rel (0) target = $region29
    $region28: #{tpu_custom_call.1} parent=1 // pred_region
      _
    $region29: #{tpu_custom_call.1} parent=1 // pred_fallthru
      _
    // Predicated region
    $region30: #{tpu_custom_call.1} parent=1 // pred_check
      _
    $region31: #{tpu_custom_call.1} parent=1 // pred_check_branch
      %54 = sbr.rel (0) target = $region33
    $region32: #{tpu_custom_call.1} parent=1 // pred_region
      %s56 = ssub.s32 512, 512
      %57 = vsyncadd [#allocation6], %s56
      %s58 = sshll.u32 [#allocation7], 4
      %s59 = int_to_ptr.vmem [resolvable:$true] %s58
      %64 = dma.hbm_to_vmem [thread:$0]  %s7, 512, %s59, [#allocation6], 128, 128, 8
    $region33: #{tpu_custom_call.1} parent=1 // pred_fallthru
      _
    // Predicated region
    $region34: #{tpu_custom_call.1} parent=1 // pred_check
      _
    $region35: #{tpu_custom_call.1} parent=1 // pred_check_branch
      %66 = sbr.rel (0) target = $region37
    $region36: #{tpu_custom_call.1} parent=1 // pred_region
      _
    $region37: #{tpu_custom_call.1} parent=1 // pred_fallthru
      _
    // Predicated region
    $region38: #{tpu_custom_call.1} parent=1 // pred_check
      _
    $region39: #{tpu_custom_call.1} parent=1 // pred_check_branch
      %68 = sbr.rel (0) target = $region41
    $region40: #{tpu_custom_call.1} parent=1 // pred_region
      _
    $region41: #{tpu_custom_call.1} parent=1 // pred_fallthru
      _
    // Predicated region
    $region42: #{tpu_custom_call.1} parent=1 // pred_check
      _
    $region43: #{tpu_custom_call.1} parent=1 // pred_check_branch
      %70 = sbr.rel (0) target = $region45
    $region44: #{tpu_custom_call.1} parent=1 // pred_region
      _
    $region45: #{tpu_custom_call.1} parent=1 // pred_fallthru
      _
    // Predicated region
    $region46: #{tpu_custom_call.1} parent=1 // pred_check
      _
    $region47: #{tpu_custom_call.1} parent=1 // pred_check_branch
      %72 = sbr.rel (0) target = $region49
    $region48: #{tpu_custom_call.1} parent=1 // pred_region
      %73 = dma.done [#allocation3], 256
    $region49: #{tpu_custom_call.1} parent=1 // pred_fallthru
      _
    // Predicated region
    $region50: #{tpu_custom_call.1} parent=1 // pred_check
      _
    $region51: #{tpu_custom_call.1} parent=1 // pred_check_branch
      %75 = sbr.rel (0) target = $region53
    $region52: #{tpu_custom_call.1} parent=1 // pred_region
      %76 = dma.done [#allocation6], 512
    $region53: #{tpu_custom_call.1} parent=1 // pred_fallthru
      _
    // Predicated region
    $region54: #{tpu_custom_call.1} parent=1 // pred_check
      _
    $region55: #{tpu_custom_call.1} parent=1 // pred_check_branch
      %78 = sbr.rel (0) target = $region57
    $region56: #{tpu_custom_call.1} parent=1 // pred_region
      %79 = dma.done [#allocation6], 512
    $region57: #{tpu_custom_call.1} parent=1 // pred_fallthru
      _
    %v80 = vld [vmem:[%s0] sm:$0xff]
    %v81 = vld [vmem:[#allocation2] sm:$0xff]
    %v82 = vld [vmem:[#allocation2 + $0x8] sm:$0xff]
    %v83 = vld [vmem:[%s2] sm:$0x1]
    %v85 = vlaneseq
    %v86 = vshrl.u32 %v85, 7
    %v87 = vsub.s32 0, %v86
    %v88 = vrot.slane %v83, %v87
    %vm90 = vcmask 130048
    %v92 = vsel %vm90, %v80, 0
    %94 = vmatprep.subr.mxu0 0.0
    %95 = vmatpush1.msra.mxu0 0.0
    %96 = vmatprep.subr.mxu0 0.0
    %97 = vmatpush1.msra.mxu0 0.0
    %98 = vmatprep.subr.mxu0 0.0
    %99 = vmatpush1.msra.mxu0 0.0
    %100 = vmatprep.subr.mxu0 0.0
    %101 = vmatpush1.msra.mxu0 0.0
    %102 = vmatprep.subr.mxu0 0.0
    %103 = vmatpush1.msra.mxu0 0.0
    %104 = vmatprep.subr.mxu0 0.0
    %105 = vmatpush1.msra.mxu0 0.0
    %106 = vmatprep.subr.mxu0 0.0
    %107 = vmatpush1.msra.mxu0 0.0
    %108 = vmatprep.subr.mxu0 0.0
    %109 = vmatpush1.msra.mxu0 0.0
    %110 = vmatprep.subr.mxu0 0.0
    %111 = vmatpush1.msra.mxu0 0.0
    %112 = vmatprep.subr.mxu0 0.0
    %113 = vmatpush1.msra.mxu0 0.0
    %114 = vmatprep.subr.mxu0 0.0
    %115 = vmatpush1.msra.mxu0 0.0
    %116 = vmatprep.subr.mxu0 0.0
    %117 = vmatpush1.msra.mxu0 0.0
    %118 = vmatprep.subr.mxu0 0.0
    %119 = vmatpush1.msra.mxu0 0.0
    %120 = vmatprep.subr.mxu0 0.0
    %121 = vmatpush1.msra.mxu0 0.0
    %122 = vmatprep.subr.mxu0 0.0
    %123 = vmatpush1.msra.mxu0 %v82
    %124 = vmatprep.subr.mxu0 0.0
    %125 = vmatpush1.msra.mxu0 %v81
    %126 = vmatprep.subr.mxu0 0.0
    %127 = vmatpush2.msra.mxu0 0.0
    %128 = vmatprep.subr.mxu0 0.0
    %129 = vmatpush2.msra.mxu0 0.0
    %130 = vmatprep.subr.mxu0 0.0
    %131 = vmatpush2.msra.mxu0 0.0
    %132 = vmatprep.subr.mxu0 0.0
    %133 = vmatpush2.msra.mxu0 0.0
    %134 = vmatprep.subr.mxu0 0.0
    %135 = vmatpush2.msra.mxu0 0.0
    %136 = vmatprep.subr.mxu0 0.0
    %137 = vmatpush2.msra.mxu0 0.0
    %138 = vmatprep.subr.mxu0 0.0
    %139 = vmatpush2.msra.mxu0 0.0
    %140 = vmatprep.subr.mxu0 0.0
    %141 = vmatpush2.msra.mxu0 0.0
    %142 = vmatprep.subr.mxu0 0.0
    %143 = vmatpush2.msra.mxu0 0.0
    %144 = vmatprep.subr.mxu0 0.0
    %145 = vmatpush2.msra.mxu0 0.0
    %146 = vmatprep.subr.mxu0 0.0
    %147 = vmatpush2.msra.mxu0 0.0
    %148 = vmatprep.subr.mxu0 0.0
    %149 = vmatpush2.msra.mxu0 0.0
    %150 = vmatprep.subr.mxu0 0.0
    %151 = vmatpush2.msra.mxu0 0.0
    %152 = vmatprep.subr.mxu0 0.0
    %153 = vmatpush2.msra.mxu0 0.0
    %154 = vmatprep.subr.mxu0 0.0
    %155 = vmatpush2.msra.mxu0 0.0
    %156 = vmatprep.subr.mxu0 0.0
    %157 = vmatpush2.msra.mxu0 0.0
    %158 = vmatprep.mubr.f32.mxu0 0.0
    %159 = vmatmul.mubr.f32.gmra.mxu0 %v92
    %v160 = vpop.f32.mrf.mxu0
    %v161 = vadd.f32 %v88, %v160
    %v162 = vpop.f32.mrf.mxu0
    %163 = vdwg.mxu0
    %v164 = vmax.f32 %v161, 0.0
    %v165 = vld [vmem:[%s3] sm:$0xff]
    %v166 = vld [vmem:[%s3 + $0x8] sm:$0xff]
    %v167 = vld [vmem:[%s3 + $0x10] sm:$0xff]
    %v168 = vld [vmem:[%s3 + $0x18] sm:$0xff]
    %v169 = vld [vmem:[%s4] sm:$0x1]
    %v171 = vlaneseq
    %v172 = vshrl.u32 %v171, 7
    %v173 = vsub.s32 0, %v172
    %v174 = vrot.slane %v169, %v173
    %vm176 = vcmask 261120
    %v178 = vsel %vm176, %v164, 0
    %180 = vmatprep.subr.mxu0 0.0
    %181 = vmatpush1.msra.mxu0 0.0
    %182 = vmatprep.subr.mxu0 0.0
    %183 = vmatpush1.msra.mxu0 0.0
    %184 = vmatprep.subr.mxu0 0.0
    %185 = vmatpush1.msra.mxu0 0.0
    %186 = vmatprep.subr.mxu0 0.0
    %187 = vmatpush1.msra.mxu0 0.0
    %188 = vmatprep.subr.mxu0 0.0
    %189 = vmatpush1.msra.mxu0 0.0
    %190 = vmatprep.subr.mxu0 0.0
    %191 = vmatpush1.msra.mxu0 0.0
    %192 = vmatprep.subr.mxu0 0.0
    %193 = vmatpush1.msra.mxu0 0.0
    %194 = vmatprep.subr.mxu0 0.0
    %195 = vmatpush1.msra.mxu0 0.0
    %196 = vmatprep.subr.mxu0 0.0
    %197 = vmatpush1.msra.mxu0 0.0
    %198 = vmatprep.subr.mxu0 0.0
    %199 = vmatpush1.msra.mxu0 0.0
    %200 = vmatprep.subr.mxu0 0.0
    %201 = vmatpush1.msra.mxu0 0.0
    %202 = vmatprep.subr.mxu0 0.0
    %203 = vmatpush1.msra.mxu0 0.0
    %204 = vmatprep.subr.mxu0 0.0
    %205 = vmatpush1.msra.mxu0 %v168
    %206 = vmatprep.subr.mxu0 0.0
    %207 = vmatpush1.msra.mxu0 %v167
    %208 = vmatprep.subr.mxu0 0.0
    %209 = vmatpush1.msra.mxu0 %v166
    %210 = vmatprep.subr.mxu0 0.0
    %211 = vmatpush1.msra.mxu0 %v165
    %212 = vmatprep.subr.mxu0 0.0
    %213 = vmatpush2.msra.mxu0 0.0
    %214 = vmatprep.subr.mxu0 0.0
    %215 = vmatpush2.msra.mxu0 0.0
    %216 = vmatprep.subr.mxu0 0.0
    %217 = vmatpush2.msra.mxu0 0.0
    %218 = vmatprep.subr.mxu0 0.0
    %219 = vmatpush2.msra.mxu0 0.0
    %220 = vmatprep.subr.mxu0 0.0
    %221 = vmatpush2.msra.mxu0 0.0
    %222 = vmatprep.subr.mxu0 0.0
    %223 = vmatpush2.msra.mxu0 0.0
    %224 = vmatprep.subr.mxu0 0.0
    %225 = vmatpush2.msra.mxu0 0.0
    %226 = vmatprep.subr.mxu0 0.0
    %227 = vmatpush2.msra.mxu0 0.0
    %228 = vmatprep.subr.mxu0 0.0
    %229 = vmatpush2.msra.mxu0 0.0
    %230 = vmatprep.subr.mxu0 0.0
    %231 = vmatpush2.msra.mxu0 0.0
    %232 = vmatprep.subr.mxu0 0.0
    %233 = vmatpush2.msra.mxu0 0.0
    %234 = vmatprep.subr.mxu0 0.0
    %235 = vmatpush2.msra.mxu0 0.0
    %236 = vmatprep.subr.mxu0 0.0
    %237 = vmatpush2.msra.mxu0 0.0
    %238 = vmatprep.subr.mxu0 0.0
    %239 = vmatpush2.msra.mxu0 0.0
    %240 = vmatprep.subr.mxu0 0.0
    %241 = vmatpush2.msra.mxu0 0.0
    %242 = vmatprep.subr.mxu0 0.0
    %243 = vmatpush2.msra.mxu0 0.0
    %244 = vmatprep.mubr.f32.mxu0 0.0
    %245 = vmatmul.mubr.f32.gmra.mxu0 %v178
    %v246 = vpop.f32.mrf.mxu0
    %v247 = vadd.f32 %v174, %v246
    %v248 = vpop.f32.mrf.mxu0
    %249 = vdwg.mxu0
    %v250 = vmax.f32 %v247, 0.0
    %v251 = vld [vmem:[#allocation5] sm:$0xff]
    %v252 = vld [vmem:[#allocation5 + $0x8] sm:$0xff]
    %v253 = vld [vmem:[#allocation5 + $0x10] sm:$0xff]
    %v254 = vld [vmem:[#allocation5 + $0x18] sm:$0xff]
    %v255 = vld [vmem:[%s6] sm:$0x1]
    %v257 = vlaneseq
    %v258 = vshrl.u32 %v257, 7
    %v259 = vsub.s32 0, %v258
    %v260 = vrot.slane %v255, %v259
    %v263 = vsel %vm176, %v250, 0
    %265 = vmatprep.subr.mxu0 0.0
    %266 = vmatpush1.msra.mxu0 0.0
    %267 = vmatprep.subr.mxu0 0.0
    %268 = vmatpush1.msra.mxu0 0.0
    %269 = vmatprep.subr.mxu0 0.0
    %270 = vmatpush1.msra.mxu0 0.0
    %271 = vmatprep.subr.mxu0 0.0
    %272 = vmatpush1.msra.mxu0 0.0
    %273 = vmatprep.subr.mxu0 0.0
    %274 = vmatpush1.msra.mxu0 0.0
    %275 = vmatprep.subr.mxu0 0.0
    %276 = vmatpush1.msra.mxu0 0.0
    %277 = vmatprep.subr.mxu0 0.0
    %278 = vmatpush1.msra.mxu0 0.0
    %279 = vmatprep.subr.mxu0 0.0
    %280 = vmatpush1.msra.mxu0 0.0
    %281 = vmatprep.subr.mxu0 0.0
    %282 = vmatpush1.msra.mxu0 0.0
    %283 = vmatprep.subr.mxu0 0.0
    %284 = vmatpush1.msra.mxu0 0.0
    %285 = vmatprep.subr.mxu0 0.0
    %286 = vmatpush1.msra.mxu0 0.0
    %287 = vmatprep.subr.mxu0 0.0
    %288 = vmatpush1.msra.mxu0 0.0
    %289 = vmatprep.subr.mxu0 0.0
    %290 = vmatpush1.msra.mxu0 %v254
    %291 = vmatprep.subr.mxu0 0.0
    %292 = vmatpush1.msra.mxu0 %v253
    %293 = vmatprep.subr.mxu0 0.0
    %294 = vmatpush1.msra.mxu0 %v252
    %295 = vmatprep.subr.mxu0 0.0
    %296 = vmatpush1.msra.mxu0 %v251
    %297 = vmatprep.subr.mxu0 0.0
    %298 = vmatpush2.msra.mxu0 0.0
    %299 = vmatprep.subr.mxu0 0.0
    %300 = vmatpush2.msra.mxu0 0.0
    %301 = vmatprep.subr.mxu0 0.0
    %302 = vmatpush2.msra.mxu0 0.0
    %303 = vmatprep.subr.mxu0 0.0
    %304 = vmatpush2.msra.mxu0 0.0
    %305 = vmatprep.subr.mxu0 0.0
    %306 = vmatpush2.msra.mxu0 0.0
    %307 = vmatprep.subr.mxu0 0.0
    %308 = vmatpush2.msra.mxu0 0.0
    %309 = vmatprep.subr.mxu0 0.0
    %310 = vmatpush2.msra.mxu0 0.0
    %311 = vmatprep.subr.mxu0 0.0
    %312 = vmatpush2.msra.mxu0 0.0
    %313 = vmatprep.subr.mxu0 0.0
    %314 = vmatpush2.msra.mxu0 0.0
    %315 = vmatprep.subr.mxu0 0.0
    %316 = vmatpush2.msra.mxu0 0.0
    %317 = vmatprep.subr.mxu0 0.0
    %318 = vmatpush2.msra.mxu0 0.0
    %319 = vmatprep.subr.mxu0 0.0
    %320 = vmatpush2.msra.mxu0 0.0
    %321 = vmatprep.subr.mxu0 0.0
    %322 = vmatpush2.msra.mxu0 0.0
    %323 = vmatprep.subr.mxu0 0.0
    %324 = vmatpush2.msra.mxu0 0.0
    %325 = vmatprep.subr.mxu0 0.0
    %326 = vmatpush2.msra.mxu0 0.0
    %327 = vmatprep.subr.mxu0 0.0
    %328 = vmatpush2.msra.mxu0 0.0
    %329 = vmatprep.mubr.f32.mxu0 0.0
    %330 = vmatmul.mubr.f32.gmra.mxu0 %v263
    %v331 = vpop.f32.mrf.mxu0
    %v332 = vadd.f32 %v260, %v331
    %v333 = vpop.f32.mrf.mxu0
    %334 = vdwg.mxu0
    %v335 = vmax.f32 %v332, 0.0
    %v336 = vld [vmem:[#allocation7] sm:$0xff]
    %v337 = vld [vmem:[#allocation7 + $0x8] sm:$0xff]
    %v338 = vld [vmem:[#allocation7 + $0x10] sm:$0xff]
    %v339 = vld [vmem:[#allocation7 + $0x18] sm:$0xff]
    %v340 = vld [vmem:[%s8] sm:$0x1]
    %v342 = vlaneseq
    %v343 = vshrl.u32 %v342, 7
    %v344 = vsub.s32 0, %v343
    %v345 = vrot.slane %v340, %v344
    %v348 = vsel %vm176, %v335, 0
    %350 = vmatprep.subr.mxu0 0.0
    %351 = vmatpush1.msra.mxu0 0.0
    %352 = vmatprep.subr.mxu0 0.0
    %353 = vmatpush1.msra.mxu0 0.0
    %354 = vmatprep.subr.mxu0 0.0
    %355 = vmatpush1.msra.mxu0 0.0
    %356 = vmatprep.subr.mxu0 0.0
    %357 = vmatpush1.msra.mxu0 0.0
    %358 = vmatprep.subr.mxu0 0.0
    %359 = vmatpush1.msra.mxu0 0.0
    %360 = vmatprep.subr.mxu0 0.0
    %361 = vmatpush1.msra.mxu0 0.0
    %362 = vmatprep.subr.mxu0 0.0
    %363 = vmatpush1.msra.mxu0 0.0
    %364 = vmatprep.subr.mxu0 0.0
    %365 = vmatpush1.msra.mxu0 0.0
    %366 = vmatprep.subr.mxu0 0.0
    %367 = vmatpush1.msra.mxu0 0.0
    %368 = vmatprep.subr.mxu0 0.0
    %369 = vmatpush1.msra.mxu0 0.0
    %370 = vmatprep.subr.mxu0 0.0
    %371 = vmatpush1.msra.mxu0 0.0
    %372 = vmatprep.subr.mxu0 0.0
    %373 = vmatpush1.msra.mxu0 0.0
    %374 = vmatprep.subr.mxu0 0.0
    %375 = vmatpush1.msra.mxu0 %v339
    %376 = vmatprep.subr.mxu0 0.0
    %377 = vmatpush1.msra.mxu0 %v338
    %378 = vmatprep.subr.mxu0 0.0
    %379 = vmatpush1.msra.mxu0 %v337
    %380 = vmatprep.subr.mxu0 0.0
    %381 = vmatpush1.msra.mxu0 %v336
    %382 = vmatprep.subr.mxu0 0.0
    %383 = vmatpush2.msra.mxu0 0.0
    %384 = vmatprep.subr.mxu0 0.0
    %385 = vmatpush2.msra.mxu0 0.0
    %386 = vmatprep.subr.mxu0 0.0
    %387 = vmatpush2.msra.mxu0 0.0
    %388 = vmatprep.subr.mxu0 0.0
    %389 = vmatpush2.msra.mxu0 0.0
    %390 = vmatprep.subr.mxu0 0.0
    %391 = vmatpush2.msra.mxu0 0.0
    %392 = vmatprep.subr.mxu0 0.0
    %393 = vmatpush2.msra.mxu0 0.0
    %394 = vmatprep.subr.mxu0 0.0
    %395 = vmatpush2.msra.mxu0 0.0
    %396 = vmatprep.subr.mxu0 0.0
    %397 = vmatpush2.msra.mxu0 0.0
    %398 = vmatprep.subr.mxu0 0.0
    %399 = vmatpush2.msra.mxu0 0.0
    %400 = vmatprep.subr.mxu0 0.0
    %401 = vmatpush2.msra.mxu0 0.0
    %402 = vmatprep.subr.mxu0 0.0
    %403 = vmatpush2.msra.mxu0 0.0
    %404 = vmatprep.subr.mxu0 0.0
    %405 = vmatpush2.msra.mxu0 0.0
    %406 = vmatprep.subr.mxu0 0.0
    %407 = vmatpush2.msra.mxu0 0.0
    %408 = vmatprep.subr.mxu0 0.0
    %409 = vmatpush2.msra.mxu0 0.0
    %410 = vmatprep.subr.mxu0 0.0
    %411 = vmatpush2.msra.mxu0 0.0
    %412 = vmatprep.subr.mxu0 0.0
    %413 = vmatpush2.msra.mxu0 0.0
    %414 = vmatprep.mubr.f32.mxu0 0.0
    %415 = vmatmul.mubr.f32.gmra.mxu0 %v348
    %v416 = vpop.f32.mrf.mxu0
    %v417 = vadd.f32 %v345, %v416
    %v418 = vpop.f32.mrf.mxu0
    %419 = vdwg.mxu0
    %v420 = vmax.f32 %v417, 0.0
    %v421 = vld [vmem:[%s9] sm:$0xff]
    %v422 = vld [vmem:[%s9 + $0x8] sm:$0xff]
    %v423 = vld [vmem:[%s9 + $0x10] sm:$0xff]
    %v424 = vld [vmem:[%s9 + $0x18] sm:$0xff]
    %v425 = vld [vmem:[%s10] sm:$0x1]
    %v427 = vlaneseq
    %v428 = vshrl.u32 %v427, 7
    %v429 = vsub.s32 0, %v428
    %v430 = vrot.slane %v425, %v429
    %v433 = vsel %vm176, %v420, 0
    %435 = vmatprep.subr.mxu0 0.0
    %436 = vmatpush1.msra.mxu0 0.0
    %437 = vmatprep.subr.mxu0 0.0
    %438 = vmatpush1.msra.mxu0 0.0
    %439 = vmatprep.subr.mxu0 0.0
    %440 = vmatpush1.msra.mxu0 0.0
    %441 = vmatprep.subr.mxu0 0.0
    %442 = vmatpush1.msra.mxu0 0.0
    %443 = vmatprep.subr.mxu0 0.0
    %444 = vmatpush1.msra.mxu0 0.0
    %445 = vmatprep.subr.mxu0 0.0
    %446 = vmatpush1.msra.mxu0 0.0
    %447 = vmatprep.subr.mxu0 0.0
    %448 = vmatpush1.msra.mxu0 0.0
    %449 = vmatprep.subr.mxu0 0.0
    %450 = vmatpush1.msra.mxu0 0.0
    %451 = vmatprep.subr.mxu0 0.0
    %452 = vmatpush1.msra.mxu0 0.0
    %453 = vmatprep.subr.mxu0 0.0
    %454 = vmatpush1.msra.mxu0 0.0
    %455 = vmatprep.subr.mxu0 0.0
    %456 = vmatpush1.msra.mxu0 0.0
    %457 = vmatprep.subr.mxu0 0.0
    %458 = vmatpush1.msra.mxu0 0.0
    %459 = vmatprep.subr.mxu0 0.0
    %460 = vmatpush1.msra.mxu0 %v424
    %461 = vmatprep.subr.mxu0 0.0
    %462 = vmatpush1.msra.mxu0 %v423
    %463 = vmatprep.subr.mxu0 0.0
    %464 = vmatpush1.msra.mxu0 %v422
    %465 = vmatprep.subr.mxu0 0.0
    %466 = vmatpush1.msra.mxu0 %v421
    %467 = vmatprep.subr.mxu0 0.0
    %468 = vmatpush2.msra.mxu0 0.0
    %469 = vmatprep.subr.mxu0 0.0
    %470 = vmatpush2.msra.mxu0 0.0
    %471 = vmatprep.subr.mxu0 0.0
    %472 = vmatpush2.msra.mxu0 0.0
    %473 = vmatprep.subr.mxu0 0.0
    %474 = vmatpush2.msra.mxu0 0.0
    %475 = vmatprep.subr.mxu0 0.0
    %476 = vmatpush2.msra.mxu0 0.0
    %477 = vmatprep.subr.mxu0 0.0
    %478 = vmatpush2.msra.mxu0 0.0
    %479 = vmatprep.subr.mxu0 0.0
    %480 = vmatpush2.msra.mxu0 0.0
    %481 = vmatprep.subr.mxu0 0.0
    %482 = vmatpush2.msra.mxu0 0.0
    %483 = vmatprep.subr.mxu0 0.0
    %484 = vmatpush2.msra.mxu0 0.0
    %485 = vmatprep.subr.mxu0 0.0
    %486 = vmatpush2.msra.mxu0 0.0
    %487 = vmatprep.subr.mxu0 0.0
    %488 = vmatpush2.msra.mxu0 0.0
    %489 = vmatprep.subr.mxu0 0.0
    %490 = vmatpush2.msra.mxu0 0.0
    %491 = vmatprep.subr.mxu0 0.0
    %492 = vmatpush2.msra.mxu0 0.0
    %493 = vmatprep.subr.mxu0 0.0
    %494 = vmatpush2.msra.mxu0 0.0
    %495 = vmatprep.subr.mxu0 0.0
    %496 = vmatpush2.msra.mxu0 0.0
    %497 = vmatprep.subr.mxu0 0.0
    %498 = vmatpush2.msra.mxu0 0.0
    %499 = vmatprep.mubr.f32.mxu0 0.0
    %500 = vmatmul.mubr.f32.gmra.mxu0 %v433
    %v501 = vpop.f32.mrf.mxu0
    %v502 = vadd.f32 %v430, %v501
    %v503 = vpop.f32.mrf.mxu0
    %504 = vdwg.mxu0
    %vm505 = vcmask 64512
    %506 = vst.msk [vmem:[#allocation8] sm:$0xff] %vm505, %v502
    // Predicated region
    $region58: #{tpu_custom_call.1} parent=1 // pred_check
      _
    $region59: #{tpu_custom_call.1} parent=1 // pred_check_branch
      %508 = sbr.rel (0) target = $region61
    $region60: #{tpu_custom_call.1} parent=1 // pred_region
      %s510 = ssub.s32 128, 128
      %511 = vsyncadd [#allocation4], %s510
      %s513 = sshll.u32 [#allocation8], 4
      %s514 = int_to_ptr.vmem [resolvable:$true] %s513
      %516 = dma.vmem_to_hbm [thread:$0]  %s514, 128, %s11, [#allocation4]
    $region61: #{tpu_custom_call.1} parent=1 // pred_fallthru
      _
    // Predicated region
    $region62: #{tpu_custom_call.1} parent=1 // pred_check
      _
    $region63: #{tpu_custom_call.1} parent=1 // pred_check_branch
      %518 = sbr.rel (0) target = $region65
    $region64: #{tpu_custom_call.1} parent=1 // pred_region
      %519 = dma.done [#allocation4], 128
    $region65: #{tpu_custom_call.1} parent=1 // pred_fallthru
      _
    %520 = vsyncpa [#allocation3], 1
    %521 = vsyncpa [#allocation6], 1
    %522 = vsyncpa [#allocation4], 1

</llo_original>
